<compile_context>
chip_gen: v5e
topology: v5e:2x2
jax: 0.10.0
libtpu: 0.0.40
codegen_flags: <defaults>
</compile_context>

<pallas_src>
import functools

import jax
import jax.numpy as jnp
from jax.experimental import pallas as pl
from jax.experimental.pallas import tpu as pltpu


# --------------------------------------------------------------------------------------
# Kernels
# --------------------------------------------------------------------------------------
def _score_head_kernel(u_ref, i_ref, w1_ref, b1_ref, w2_ref, b2_ref, o_ref):
    # u_ref, i_ref : (TB, D)   bf16   user / item embedding tiles
    # w1_ref       : (2D, H)   bf16   first-layer weight (H = D for one head, 2D fused)
    # b1_ref       : (1, H)    f32
    # w2_ref       : (R, H)    bf16   second-layer weight rows (R = 1 or 2 heads)
    # b2_ref       : (R, 1)    f32
    # o_ref        : (R, TB)   f32    lane-dense scores for this batch tile
    x = jnp.concatenate([u_ref[...], i_ref[...]], axis=-1)          # (TB, 2D) bf16, VMEM only
    h = jnp.dot(x, w1_ref[...], preferred_element_type=jnp.float32)  # single K=128 MXU dot
    h = jnp.maximum(h + b1_ref[...], 0.0)                            # (TB, H) f32
    # (R, H) x (TB, H)^T -> (R, TB): lane-dense output, no width-1 MXU result column.
    scores = jax.lax.dot_general(
        w2_ref[...], h.astype(jnp.bfloat16),
        dimension_numbers=(((1,), (1,)), ((), ())),
        preferred_element_type=jnp.float32)
    o_ref[...] = scores + b2_ref[...]


def _gen_head_kernel(u_ref, i_ref, w1_ref, b1_ref, w2_ref, b2_ref, o_ref):
    # w2_ref: (D, Vp) bf16, b2_ref: (1, Vp) f32, o_ref: (TB, Vp) f32 (Vp = V padded to 1024).
    x = jnp.concatenate([u_ref[...], i_ref[...]], axis=-1)           # (TB, 2D) bf16
    h = jnp.dot(x, w1_ref[...], preferred_element_type=jnp.float32)  # single K=128 MXU dot
    h = jnp.maximum(h + b1_ref[...], 0.0)
    logits = jnp.dot(h.astype(jnp.bfloat16), w2_ref[...],
                     preferred_element_type=jnp.float32)
    o_ref[...] = logits + b2_ref[...]


# --------------------------------------------------------------------------------------
# Wrappers
# --------------------------------------------------------------------------------------
def _pad_batch(x, tb):
    pad = (-x.shape[0]) % tb
    if pad:
        x = jnp.pad(x, ((0, pad), (0, 0)))
    return x


def _score_head(user_emb, item_emb, head, tb):
    b, d = user_emb.shape
    u = _pad_batch(user_emb, tb)
    it = _pad_batch(item_emb, tb)
    b_pad = u.shape[0]
    n_tiles = b_pad // tb
    r, hdim = head["w2"].shape

    out = pl.pallas_call(
        _score_head_kernel,
        out_shape=jax.ShapeDtypeStruct((r, b_pad), jnp.float32),
        grid=(n_tiles,),
        in_specs=[
            pl.BlockSpec((tb, d), lambda i: (i, 0)),         # user tile
            pl.BlockSpec((tb, d), lambda i: (i, 0)),         # item tile
            pl.BlockSpec((2 * d, hdim), lambda i: (0, 0)),   # w1 (resident)
            pl.BlockSpec((1, hdim), lambda i: (0, 0)),       # b1
            pl.BlockSpec((r, hdim), lambda i: (0, 0)),       # w2 rows
            pl.BlockSpec((r, 1), lambda i: (0, 0)),          # b2
        ],
        out_specs=pl.BlockSpec((r, tb), lambda i: (0, i)),   # lane-dense (R, B_pad) slab
        compiler_params=pltpu.CompilerParams(
            dimension_semantics=("parallel",)),
    )(u, it, head["w1"], head["b1"], head["w2"], head["b2"])

    return out[:, :b]                                        # (R, B), drop batch padding


def _gen_head(user_emb, item_emb, head, tb):
    b, d = user_emb.shape
    v_pad = head["w2"].shape[1]
    u = _pad_batch(user_emb, tb)
    it = _pad_batch(item_emb, tb)
    b_pad = u.shape[0]
    n_tiles = b_pad // tb

    out = pl.pallas_call(
        _gen_head_kernel,
        out_shape=jax.ShapeDtypeStruct((b_pad, v_pad), jnp.float32),
        grid=(n_tiles,),
        in_specs=[
            pl.BlockSpec((tb, d), lambda i: (i, 0)),
            pl.BlockSpec((tb, d), lambda i: (i, 0)),
            pl.BlockSpec((2 * d, d), lambda i: (0, 0)),
            pl.BlockSpec((1, d), lambda i: (0, 0)),
            pl.BlockSpec((d, v_pad), lambda i: (0, 0)),
            pl.BlockSpec((1, v_pad), lambda i: (0, 0)),
        ],
        out_specs=pl.BlockSpec((tb, v_pad), lambda i: (i, 0)),
        compiler_params=pltpu.CompilerParams(
            dimension_semantics=("parallel",)),
    )(u, it, head["w1"], head["b1"], head["w2"], head["b2"])

    return out[:b]                                           # (B, V_pad); caller drops V pad


@functools.partial(jax.jit, static_argnames=("mode", "tb", "vocab_size"))
def mig_dpg_forward(params, users, items, mode="recommend", tb=128, vocab_size=1000):
    """Forward pass of MIG_DPG_NoMultiModal (inference semantics).

    tb: batch tile size (multiple of 128). For production batches sweep 512-1024, and on
    v7x pick tb so the batch yields >= 2 grid tiles to engage both TensorCores.
    """
    # Embedding tables are bf16 at init: the gather reads bf16 rows directly (no f32
    # gather + bf16 rewrite round trip); MXU accumulation stays f32.
    user_emb = jnp.take(params["user_embedding"], users, axis=0)
    item_emb = jnp.take(params["item_embedding"], items, axis=0)

    if mode == "recommend":
        # Dropout(0.2) is the identity in eval mode.
        # TODO(synk): train-mode dropout masking is not implemented in the kernel.
        return jnp.squeeze(_score_head(user_emb, item_emb, params["rec"], tb)[0])
    elif mode == "dpo":
        return jnp.squeeze(_score_head(user_emb, item_emb, params["dpo"], tb)[0])
    elif mode == "recommend_dpo":
        # Fused path: one pallas_call emits both heads' scores, embeddings read once.
        out = _score_head(user_emb, item_emb, params["rec_dpo"], tb)
        return jnp.squeeze(out[0]), jnp.squeeze(out[1])
    elif mode == "generate":
        out = _gen_head(user_emb, item_emb, params["gen"], tb)
        return out[:, :vocab_size]                           # drop vocab lane padding
    else:
        raise ValueError(f"unknown mode: {mode}")


# --------------------------------------------------------------------------------------
# Parameter init (PyTorch-style uniform fan-in for Linear, normal for Embedding)
# --------------------------------------------------------------------------------------
def init_params(key, num_users, num_items, embedding_dim=64, vocab_size=1000):
    d = embedding_dim
    v_pad = ((vocab_size + 127) // 128) * 128                # lane-align vocab (1000 -> 1024)
    ks = iter(jax.random.split(key, 16))

    def linear(fan_in, fan_out):
        lim = 1.0 / (fan_in ** 0.5)
        w = jax.random.uniform(next(ks), (fan_in, fan_out), jnp.float32, -lim, lim)
        b = jax.random.uniform(next(ks), (fan_out,), jnp.float32, -lim, lim)
        return w, b

    def scalar_head():
        w1, b1 = linear(2 * d, d)
        w2, b2 = linear(d, 1)
        return {
            "w1": w1.astype(jnp.bfloat16),                   # single (2D, D) operand: K=128 dot
            "b1": b1.reshape(1, d),
            "w2": w2.reshape(1, d).astype(jnp.bfloat16),     # row layout, bf16 second layer
            "b2": b2.reshape(1, 1),
        }

    def gen_head():
        w1, b1 = linear(2 * d, d)
        w2, b2 = linear(d, vocab_size)
        w2p = jnp.zeros((d, v_pad), jnp.float32).at[:, :vocab_size].set(w2)
        b2p = jnp.zeros((1, v_pad), jnp.float32).at[0, :vocab_size].set(b2)
        return {
            "w1": w1.astype(jnp.bfloat16),
            "b1": b1.reshape(1, d),
            "w2": w2p.astype(jnp.bfloat16),                  # bf16, vocab padded to 1024
            "b2": b2p,
        }

    rec, dpo, gen = scalar_head(), scalar_head(), gen_head()

    # Fused recommend+dpo head: block-diagonal stacking so one kernel emits both scores.
    z = jnp.zeros((1, d), jnp.bfloat16)
    rec_dpo = {
        "w1": jnp.concatenate([rec["w1"], dpo["w1"]], axis=1),          # (2D, 2D)
        "b1": jnp.concatenate([rec["b1"], dpo["b1"]], axis=1),          # (1, 2D)
        "w2": jnp.concatenate(
            [jnp.concatenate([rec["w2"], z], axis=1),
             jnp.concatenate([z, dpo["w2"]], axis=1)], axis=0),         # (2, 2D)
        "b2": jnp.concatenate([rec["b2"], dpo["b2"]], axis=0),          # (2, 1)
    }

    return {
        "user_embedding": jax.random.normal(
            next(ks), (num_users, d), jnp.float32).astype(jnp.bfloat16),
        "item_embedding": jax.random.normal(
            next(ks), (num_items, d), jnp.float32).astype(jnp.bfloat16),
        "rec": rec,
        "dpo": dpo,
        "gen": gen,
        "rec_dpo": rec_dpo,
    }


# --------------------------------------------------------------------------------------
# Pure-JAX references (identical bf16 quantization points, f32 accumulation)
# --------------------------------------------------------------------------------------
def _ref_score_head(u_bf, i_bf, head):
    x = jnp.concatenate([u_bf, i_bf], axis=-1)
    h = jnp.dot(x, head["w1"], preferred_element_type=jnp.float32) + head["b1"]
    h = jnp.maximum(h, 0.0)
    s = jnp.dot(h.astype(jnp.bfloat16), head["w2"].T,
                preferred_element_type=jnp.float32) + head["b2"][0, 0]
    return jnp.squeeze(s)


def _ref_gen_head(u_bf, i_bf, head, vocab_size):
    x = jnp.concatenate([u_bf, i_bf], axis=-1)
    h = jnp.dot(x, head["w1"], preferred_element_type=jnp.float32) + head["b1"]
    h = jnp.maximum(h, 0.0)
    logits = jnp.dot(h.astype(jnp.bfloat16), head["w2"],
                     preferred_element_type=jnp.float32) + head["b2"]
    return logits[:, :vocab_size]


if __name__ == "__main__":
    NUM_USERS, NUM_ITEMS = 50, 100
    D = 64          # embedding_dim (module default)
    V = 1000        # vocab_size (module default)
    B = 8           # batch

    key = jax.random.PRNGKey(0)
    k_param, k_u, k_i = jax.random.split(key, 3)
    params = init_params(k_param, NUM_USERS, NUM_ITEMS, D, V)
    users = jax.random.randint(k_u, (B,), 0, NUM_USERS)
    items = jax.random.randint(k_i, (B,), 0, NUM_ITEMS)

    rec = jax.block_until_ready(mig_dpg_forward(params, users, items, mode="recommend"))
    dpo = jax.block_until_ready(mig_dpg_forward(params, users, items, mode="dpo"))
    rec_f, dpo_f = jax.block_until_ready(
        mig_dpg_forward(params, users, items, mode="recommend_dpo"))
    gen = jax.block_until_ready(
        mig_dpg_forward(params, users, items, mode="generate", vocab_size=V))

    u_bf = jnp.take(params["user_embedding"], users, axis=0)
    i_bf = jnp.take(params["item_embedding"], items, axis=0)
    rec_ref = _ref_score_head(u_bf, i_bf, params["rec"])
    dpo_ref = _ref_score_head(u_bf, i_bf, params["dpo"])
    gen_ref = _ref_gen_head(u_bf, i_bf, params["gen"], V)

    assert rec.shape == (B,) and dpo.shape == (B,) and gen.shape == (B, V)
    assert jnp.allclose(rec, rec_ref, atol=1e-4, rtol=1e-4)
    assert jnp.allclose(dpo, dpo_ref, atol=1e-4, rtol=1e-4)
    assert jnp.allclose(gen, gen_ref, atol=1e-4, rtol=1e-4)
    # Fused dual-head path must agree with the individual heads.
    assert jnp.allclose(rec_f, rec, atol=1e-5, rtol=1e-5)
    assert jnp.allclose(dpo_f, dpo, atol=1e-5, rtol=1e-5)

    print("KERNEL_OK")
</pallas_src>

<mosaic_0001>
module attributes {stable_mosaic.version = 11 : i64} {
  func.func @_score_head_kernel(%arg0: i32, %arg1: memref<128x64xbf16, #tpu.memory_space<vmem>>, %arg2: memref<128x64xbf16, #tpu.memory_space<vmem>>, %arg3: memref<128x64xbf16, #tpu.memory_space<vmem>>, %arg4: memref<1x64xf32, #tpu.memory_space<vmem>>, %arg5: memref<1x64xbf16, #tpu.memory_space<vmem>>, %arg6: memref<1x1xf32, #tpu.memory_space<vmem>>, %arg7: memref<1x128xf32, #tpu.memory_space<vmem>>) attributes {dimension_semantics = [#tpu.dimension_semantics<parallel>], iteration_bounds = array<i64: 1>, scalar_prefetch = 0 : i64, scratch_operands = 0 : i64, tpu.core_type = #tpu.core_type<tc>, window_params = [{transform_indices = @transform_0, window_bounds = array<i64: 128, 64>}, {transform_indices = @transform_1, window_bounds = array<i64: 128, 64>}, {pipeline_mode = #tpu.pipeline_mode<synchronous>, transform_indices = @transform_2, window_bounds = array<i64: 128, 64>}, {pipeline_mode = #tpu.pipeline_mode<synchronous>, transform_indices = @transform_3, window_bounds = array<i64: 1, 64>}, {pipeline_mode = #tpu.pipeline_mode<synchronous>, transform_indices = @transform_4, window_bounds = array<i64: 1, 64>}, {pipeline_mode = #tpu.pipeline_mode<synchronous>, transform_indices = @transform_5, window_bounds = array<i64: 1, 1>}, {transform_indices = @transform_6, window_bounds = array<i64: 1, 128>}]} {
    %c0 = arith.constant 0 : index
    %c0_0 = arith.constant 0 : index
    %0 = vector.load %arg1[%c0, %c0_0] : memref<128x64xbf16, #tpu.memory_space<vmem>>, vector<128x64xbf16>
    %c0_1 = arith.constant 0 : index
    %c0_2 = arith.constant 0 : index
    %1 = vector.load %arg2[%c0_1, %c0_2] : memref<128x64xbf16, #tpu.memory_space<vmem>>, vector<128x64xbf16>
    %2 = tpu.concatenate %0, %1 in 1 : vector<128x64xbf16>, vector<128x64xbf16> -> vector<128x128xbf16>
    %c0_3 = arith.constant 0 : index
    %c0_4 = arith.constant 0 : index
    %3 = vector.load %arg3[%c0_3, %c0_4] : memref<128x64xbf16, #tpu.memory_space<vmem>>, vector<128x64xbf16>
    %cst = arith.constant dense<0.000000e+00> : vector<128x64xf32>
    %4 = tpu.matmul %2, %3, %cst {dimension_numbers = #tpu.dot_dimension_numbers<[1], [0], [0], [1], [0, 0, 1, 1], [], []>} : vector<128x128xbf16>, vector<128x64xbf16>, vector<128x64xf32> -> vector<128x64xf32>
    %c0_5 = arith.constant 0 : index
    %c0_6 = arith.constant 0 : index
    %5 = vector.load %arg4[%c0_5, %c0_6] : memref<1x64xf32, #tpu.memory_space<vmem>>, vector<1x64xf32>
    %6 = vector.broadcast %5 : vector<1x64xf32> to vector<128x64xf32>
    %7 = arith.addf %4, %6 : vector<128x64xf32>
    %cst_7 = arith.constant 0.000000e+00 : f32
    %8 = vector.broadcast %cst_7 : f32 to vector<128x64xf32>
    %9 = arith.maximumf %7, %8 : vector<128x64xf32>
    %c0_8 = arith.constant 0 : index
    %c0_9 = arith.constant 0 : index
    %10 = vector.load %arg5[%c0_8, %c0_9] : memref<1x64xbf16, #tpu.memory_space<vmem>>, vector<1x64xbf16>
    %11 = arith.truncf %9 : vector<128x64xf32> to vector<128x64xbf16>
    %cst_10 = arith.constant dense<0.000000e+00> : vector<1x128xf32>
    %12 = tpu.matmul %10, %11, %cst_10 {dimension_numbers = #tpu.dot_dimension_numbers<[1], [1], [0], [0], [0, 0, 1, 0], [], []>} : vector<1x64xbf16>, vector<128x64xbf16>, vector<1x128xf32> -> vector<1x128xf32>
    %c0_11 = arith.constant 0 : index
    %c0_12 = arith.constant 0 : index
    %13 = vector.load %arg6[%c0_11, %c0_12] : memref<1x1xf32, #tpu.memory_space<vmem>>, vector<1x1xf32>
    %14 = vector.broadcast %13 : vector<1x1xf32> to vector<1x128xf32>
    %15 = arith.addf %12, %14 : vector<1x128xf32>
    %c0_13 = arith.constant 0 : index
    %c0_14 = arith.constant 0 : index
    %16 = vector.load %arg7[%c0_13, %c0_14] : memref<1x128xf32, #tpu.memory_space<vmem>>, vector<1x128xf32>
    tpu.vector_store %arg7[%c0_13, %c0_14], %15 {strides = array<i32>} : memref<1x128xf32, #tpu.memory_space<vmem>>, vector<1x128xf32>,
    return
  }
  func.func @transform_0(%arg0: i32) -> (i32, i32) {
    %c0_i32 = arith.constant 0 : i32
    %c0_i32_0 = arith.constant 0 : i32
    return %arg0, %c0_i32 : i32, i32
  }
  func.func @transform_1(%arg0: i32) -> (i32, i32) {
    %c0_i32 = arith.constant 0 : i32
    %c0_i32_0 = arith.constant 0 : i32
    return %arg0, %c0_i32 : i32, i32
  }
  func.func @transform_2(%arg0: i32) -> (i32, i32) {
    %c0_i32 = arith.constant 0 : i32
    %c0_i32_0 = arith.constant 0 : i32
    %c0_i32_1 = arith.constant 0 : i32
    return %c0_i32, %c0_i32_0 : i32, i32
  }
  func.func @transform_3(%arg0: i32) -> (i32, i32) {
    %c0_i32 = arith.constant 0 : i32
    %c0_i32_0 = arith.constant 0 : i32
    %c0_i32_1 = arith.constant 0 : i32
    return %c0_i32, %c0_i32_0 : i32, i32
  }
  func.func @transform_4(%arg0: i32) -> (i32, i32) {
    %c0_i32 = arith.constant 0 : i32
    %c0_i32_0 = arith.constant 0 : i32
    %c0_i32_1 = arith.constant 0 : i32
    return %c0_i32, %c0_i32_0 : i32, i32
  }
  func.func @transform_5(%arg0: i32) -> (i32, i32) {
    %c0_i32 = arith.constant 0 : i32
    %c0_i32_0 = arith.constant 0 : i32
    %c0_i32_1 = arith.constant 0 : i32
    return %c0_i32, %c0_i32_0 : i32, i32
  }
  func.func @transform_6(%arg0: i32) -> (i32, i32) {
    %c0_i32 = arith.constant 0 : i32
    %c0_i32_0 = arith.constant 0 : i32
    return %c0_i32, %arg0 : i32, i32
  }
}

</mosaic_0001>

<llo_original>
// kernel: mig_dpg_forward.1
$region0: #{mig_dpg_forward.1}
  #allocation0 [shape = 'u32[]', space=smem, size = 0x4, offset = 0x4, fixed_abs, tag = 'smem constant byte address 0x4 - core index']
  #allocation1 [shape = 'u32[72,128]{1,0:T(1,128)}', space=vmem, size = 0x9000, scoped, tag = 'internal scratch']
  #allocation2 [shape = 'f32[1,1]{1,0:T(1,128)S(1)}', space=vmem, size = 0x200, scoped, tag = 'scoped memory for mig_dpg_forward.1']
  %s0 = inlined_call_operand.vmem [shape: bf16[128,64], index: 0, kind: input, shape index: {}]
  %s1 = inlined_call_operand.vmem [shape: bf16[128,64], index: 1, kind: input, shape index: {}]
  %s2 = inlined_call_operand.vmem [shape: bf16[128,64], index: 2, kind: input, shape index: {}]
  %s3 = inlined_call_operand.vmem [shape: f32[1,64], index: 3, kind: input, shape index: {}]
  %s4 = inlined_call_operand.vmem [shape: bf16[1,64], index: 4, kind: input, shape index: {}]
  %s5 = inlined_call_operand.<no memory space> [shape: f32[1,1], index: 5, kind: input, shape index: {}]
  %s6 = inlined_call_operand.vmem [shape: f32[1,128], index: 6, kind: output, shape index: {}]
  %s7 = sld [smem:[#allocation0]]
  $region34: #{mig_dpg_forward.1} parent=0
    _
  %s9 = ssub.s32 1, %s7
  %s10 = scalar_select 0, %s9, %s7
  %v11 = vstv %s5
  %12 = vst [vmem:[#allocation2] sm:$0x1] %v11
  // Predicated region
  $region2: #{mig_dpg_forward.1} parent=0 // pred_check
    _
  $region3: #{mig_dpg_forward.1} parent=0 // pred_check_branch
    %14 = sbr.rel (0) target = $region5
  $region4: #{mig_dpg_forward.1} parent=0 // pred_region
    _
  $region5: #{mig_dpg_forward.1} parent=0 // pred_fallthru
    _
  // Predicated region
  $region6: #{mig_dpg_forward.1} parent=0 // pred_check
    _
  $region7: #{mig_dpg_forward.1} parent=0 // pred_check_branch
    %16 = sbr.rel (0) target = $region9
  $region8: #{mig_dpg_forward.1} parent=0 // pred_region
    _
  $region9: #{mig_dpg_forward.1} parent=0 // pred_fallthru
    _
  // Predicated region
  $region10: #{mig_dpg_forward.1} parent=0 // pred_check
    _
  $region11: #{mig_dpg_forward.1} parent=0 // pred_check_branch
    %18 = sbr.rel (0) target = $region13
  $region12: #{mig_dpg_forward.1} parent=0 // pred_region
    _
  $region13: #{mig_dpg_forward.1} parent=0 // pred_fallthru
    _
  // Predicated region
  $region14: #{mig_dpg_forward.1} parent=0 // pred_check
    _
  $region15: #{mig_dpg_forward.1} parent=0 // pred_check_branch
    %20 = sbr.rel (0) target = $region17
  $region16: #{mig_dpg_forward.1} parent=0 // pred_region
    _
  $region17: #{mig_dpg_forward.1} parent=0 // pred_fallthru
    _
  // Predicated region
  $region18: #{mig_dpg_forward.1} parent=0 // pred_check
    _
  $region19: #{mig_dpg_forward.1} parent=0 // pred_check_branch
    %22 = sbr.rel (0) target = $region21
  $region20: #{mig_dpg_forward.1} parent=0 // pred_region
    _
  $region21: #{mig_dpg_forward.1} parent=0 // pred_fallthru
    _
  // Predicated region
  $region22: #{mig_dpg_forward.1} parent=0 // pred_check
    _
  $region23: #{mig_dpg_forward.1} parent=0 // pred_check_branch
    %24 = sbr.rel (0) target = $region25
  $region24: #{mig_dpg_forward.1} parent=0 // pred_region
    _
  $region25: #{mig_dpg_forward.1} parent=0 // pred_fallthru
    _
  %v25 = vld [vmem:[%s0] sm:$0xf]
  %v26 = vld [vmem:[%s0 + $0x4] sm:$0xf]
  %v27 = vld [vmem:[%s0 + $0x8] sm:$0xf]
  %v28 = vld [vmem:[%s0 + $0xc] sm:$0xf]
  %v29 = vld [vmem:[%s0 + $0x10] sm:$0xf]
  %v30 = vld [vmem:[%s0 + $0x14] sm:$0xf]
  %v31 = vld [vmem:[%s0 + $0x18] sm:$0xf]
  %v32 = vld [vmem:[%s0 + $0x1c] sm:$0xf]
  %v33 = vld [vmem:[%s0 + $0x20] sm:$0xf]
  %v34 = vld [vmem:[%s0 + $0x24] sm:$0xf]
  %v35 = vld [vmem:[%s0 + $0x28] sm:$0xf]
  %v36 = vld [vmem:[%s0 + $0x2c] sm:$0xf]
  %v37 = vld [vmem:[%s0 + $0x30] sm:$0xf]
  %v38 = vld [vmem:[%s0 + $0x34] sm:$0xf]
  %v39 = vld [vmem:[%s0 + $0x38] sm:$0xf]
  %v40 = vld [vmem:[%s0 + $0x3c] sm:$0xf]
  %v41 = vld [vmem:[%s1] sm:$0xf]
  %v42 = vld [vmem:[%s1 + $0x4] sm:$0xf]
  %v43 = vld [vmem:[%s1 + $0x8] sm:$0xf]
  %v44 = vld [vmem:[%s1 + $0xc] sm:$0xf]
  %v45 = vld [vmem:[%s1 + $0x10] sm:$0xf]
  %v46 = vld [vmem:[%s1 + $0x14] sm:$0xf]
  %v47 = vld [vmem:[%s1 + $0x18] sm:$0xf]
  %v48 = vld [vmem:[%s1 + $0x1c] sm:$0xf]
  %v49 = vld [vmem:[%s1 + $0x20] sm:$0xf]
  %v50 = vld [vmem:[%s1 + $0x24] sm:$0xf]
  %v51 = vld [vmem:[%s1 + $0x28] sm:$0xf]
  %v52 = vld [vmem:[%s1 + $0x2c] sm:$0xf]
  %v53 = vld [vmem:[%s1 + $0x30] sm:$0xf]
  %v54 = vld [vmem:[%s1 + $0x34] sm:$0xf]
  %v55 = vld [vmem:[%s1 + $0x38] sm:$0xf]
  %v56 = vld [vmem:[%s1 + $0x3c] sm:$0xf]
  %v73 = vunpack.c.l.b16 %v25
  %v74 = vunpack.c.l.b16 %v26
  %v75 = vunpack.c.l.b16 %v27
  %v76 = vunpack.c.l.b16 %v28
  %v77 = vunpack.c.l.b16 %v29
  %v78 = vunpack.c.l.b16 %v30
  %v79 = vunpack.c.l.b16 %v31
  %v80 = vunpack.c.l.b16 %v32
  %v81 = vunpack.c.l.b16 %v33
  %v82 = vunpack.c.l.b16 %v34
  %v83 = vunpack.c.l.b16 %v35
  %v84 = vunpack.c.l.b16 %v36
  %v85 = vunpack.c.l.b16 %v37
  %v86 = vunpack.c.l.b16 %v38
  %v87 = vunpack.c.l.b16 %v39
  %v88 = vunpack.c.l.b16 %v40
  %v89 = vpack.c.b16 %v74, %v73
  %v90 = vpack.c.b16 %v76, %v75
  %v91 = vpack.c.b16 %v78, %v77
  %v92 = vpack.c.b16 %v80, %v79
  %v93 = vpack.c.b16 %v82, %v81
  %v94 = vpack.c.b16 %v84, %v83
  %v95 = vpack.c.b16 %v86, %v85
  %v96 = vpack.c.b16 %v88, %v87
  %v113 = vunpack.c.l.b16 %v41
  %v114 = vunpack.c.l.b16 %v42
  %v115 = vunpack.c.l.b16 %v43
  %v116 = vunpack.c.l.b16 %v44
  %v117 = vunpack.c.l.b16 %v45
  %v118 = vunpack.c.l.b16 %v46
  %v119 = vunpack.c.l.b16 %v47
  %v120 = vunpack.c.l.b16 %v48
  %v121 = vunpack.c.l.b16 %v49
  %v122 = vunpack.c.l.b16 %v50
  %v123 = vunpack.c.l.b16 %v51
  %v124 = vunpack.c.l.b16 %v52
  %v125 = vunpack.c.l.b16 %v53
  %v126 = vunpack.c.l.b16 %v54
  %v127 = vunpack.c.l.b16 %v55
  %v128 = vunpack.c.l.b16 %v56
  %v129 = vpack.c.b16 %v114, %v113
  %v130 = vpack.c.b16 %v116, %v115
  %v131 = vpack.c.b16 %v118, %v117
  %v132 = vpack.c.b16 %v120, %v119
  %v133 = vpack.c.b16 %v122, %v121
  %v134 = vpack.c.b16 %v124, %v123
  %v135 = vpack.c.b16 %v126, %v125
  %v136 = vpack.c.b16 %v128, %v127
  %137 = vrot.lane.b32.xlu0 %v129, 64
  %v138 = vpop.permute.xlu0 %137
  %139 = vrot.lane.b32.xlu0 %v130, 64
  %v140 = vpop.permute.xlu0 %139
  %141 = vrot.lane.b32.xlu0 %v131, 64
  %v142 = vpop.permute.xlu0 %141
  %143 = vrot.lane.b32.xlu0 %v132, 64
  %v144 = vpop.permute.xlu0 %143
  %145 = vrot.lane.b32.xlu0 %v133, 64
  %v146 = vpop.permute.xlu0 %145
  %147 = vrot.lane.b32.xlu0 %v134, 64
  %v148 = vpop.permute.xlu0 %147
  %149 = vrot.lane.b32.xlu0 %v135, 64
  %v150 = vpop.permute.xlu0 %149
  %151 = vrot.lane.b32.xlu0 %v136, 64
  %v152 = vpop.permute.xlu0 %151
  %vm153 = vcmask 523264
  %v156 = vsel %vm153, %v89, %v138
  %v160 = vsel %vm153, %v90, %v140
  %v164 = vsel %vm153, %v91, %v142
  %v168 = vsel %vm153, %v92, %v144
  %v172 = vsel %vm153, %v93, %v146
  %v176 = vsel %vm153, %v94, %v148
  %v180 = vsel %vm153, %v95, %v150
  %v184 = vsel %vm153, %v96, %v152
  %v186 = vld [vmem:[%s2] sm:$0xf]
  %v187 = vld [vmem:[%s2 + $0x4] sm:$0xf]
  %v188 = vld [vmem:[%s2 + $0x8] sm:$0xf]
  %v189 = vld [vmem:[%s2 + $0xc] sm:$0xf]
  %v190 = vld [vmem:[%s2 + $0x10] sm:$0xf]
  %v191 = vld [vmem:[%s2 + $0x14] sm:$0xf]
  %v192 = vld [vmem:[%s2 + $0x18] sm:$0xf]
  %v193 = vld [vmem:[%s2 + $0x1c] sm:$0xf]
  %v194 = vld [vmem:[%s2 + $0x20] sm:$0xf]
  %v195 = vld [vmem:[%s2 + $0x24] sm:$0xf]
  %v196 = vld [vmem:[%s2 + $0x28] sm:$0xf]
  %v197 = vld [vmem:[%s2 + $0x2c] sm:$0xf]
  %v198 = vld [vmem:[%s2 + $0x30] sm:$0xf]
  %v199 = vld [vmem:[%s2 + $0x34] sm:$0xf]
  %v200 = vld [vmem:[%s2 + $0x38] sm:$0xf]
  %v201 = vld [vmem:[%s2 + $0x3c] sm:$0xf]
  %v202 = vld [vmem:[%s3] sm:$0x1]
  %v204 = vperm.slane %v202, 0
  %v222 = vunpack.c.l.b16 %v186
  %v223 = vunpack.c.l.b16 %v187
  %v224 = vunpack.c.l.b16 %v188
  %v225 = vunpack.c.l.b16 %v189
  %v226 = vunpack.c.l.b16 %v190
  %v227 = vunpack.c.l.b16 %v191
  %v228 = vunpack.c.l.b16 %v192
  %v229 = vunpack.c.l.b16 %v193
  %v230 = vunpack.c.l.b16 %v194
  %v231 = vunpack.c.l.b16 %v195
  %v232 = vunpack.c.l.b16 %v196
  %v233 = vunpack.c.l.b16 %v197
  %v234 = vunpack.c.l.b16 %v198
  %v235 = vunpack.c.l.b16 %v199
  %v236 = vunpack.c.l.b16 %v200
  %v237 = vunpack.c.l.b16 %v201
  %v238 = vpack.c.b16 %v223, %v222
  %v239 = vpack.c.b16 %v225, %v224
  %v240 = vpack.c.b16 %v227, %v226
  %v241 = vpack.c.b16 %v229, %v228
  %v242 = vpack.c.b16 %v231, %v230
  %v243 = vpack.c.b16 %v233, %v232
  %v244 = vpack.c.b16 %v235, %v234
  %v245 = vpack.c.b16 %v237, %v236
  %254 = vmatpush.bf16.msra.mxu0 %v245
  %255 = vmatpush.bf16.msra.mxu0 %v244
  %256 = vmatpush.bf16.msra.mxu0 %v243
  %257 = vmatpush.bf16.msra.mxu0 %v242
  %258 = vmatpush.bf16.msra.mxu0 %v241
  %259 = vmatpush.bf16.msra.mxu0 %v240
  %260 = vmatpush.bf16.msra.mxu0 %v239
  %261 = vmatpush.bf16.msra.mxu0 %v238
  %262 = vmatmul.bf16.gmra.mxu0 %v156
  %v263 = vpop.f32.mrf.mxu0
  %v264 = vadd.f32 %v204, %v263
  %v265 = vpop.f32.mrf.mxu0
  %v266 = vadd.f32 %v204, %v265
  %267 = vmatmul.bf16.gmra.mxu0 %v160
  %v268 = vpop.f32.mrf.mxu0
  %v269 = vadd.f32 %v204, %v268
  %v270 = vpop.f32.mrf.mxu0
  %v271 = vadd.f32 %v204, %v270
  %272 = vmatmul.bf16.gmra.mxu0 %v164
  %v273 = vpop.f32.mrf.mxu0
  %v274 = vadd.f32 %v204, %v273
  %v275 = vpop.f32.mrf.mxu0
  %v276 = vadd.f32 %v204, %v275
  %277 = vmatmul.bf16.gmra.mxu0 %v168
  %v278 = vpop.f32.mrf.mxu0
  %v279 = vadd.f32 %v204, %v278
  %v280 = vpop.f32.mrf.mxu0
  %v281 = vadd.f32 %v204, %v280
  %282 = vmatmul.bf16.gmra.mxu0 %v172
  %v283 = vpop.f32.mrf.mxu0
  %v284 = vadd.f32 %v204, %v283
  %v285 = vpop.f32.mrf.mxu0
  %v286 = vadd.f32 %v204, %v285
  %287 = vmatmul.bf16.gmra.mxu0 %v176
  %v288 = vpop.f32.mrf.mxu0
  %v289 = vadd.f32 %v204, %v288
  %v290 = vpop.f32.mrf.mxu0
  %v291 = vadd.f32 %v204, %v290
  %292 = vmatmul.bf16.gmra.mxu0 %v180
  %v293 = vpop.f32.mrf.mxu0
  %v294 = vadd.f32 %v204, %v293
  %v295 = vpop.f32.mrf.mxu0
  %v296 = vadd.f32 %v204, %v295
  %297 = vmatmul.bf16.gmra.mxu0 %v184
  %v298 = vpop.f32.mrf.mxu0
  %v299 = vadd.f32 %v204, %v298
  %v300 = vpop.f32.mrf.mxu0
  %v301 = vadd.f32 %v204, %v300
  %302 = vdwg.mxu0
  %v303 = vmax.f32 %v264, 0.0
  %v304 = vmax.f32 %v266, 0.0
  %v305 = vmax.f32 %v269, 0.0
  %v306 = vmax.f32 %v271, 0.0
  %v307 = vmax.f32 %v274, 0.0
  %v308 = vmax.f32 %v276, 0.0
  %v309 = vmax.f32 %v279, 0.0
  %v310 = vmax.f32 %v281, 0.0
  %v311 = vmax.f32 %v284, 0.0
  %v312 = vmax.f32 %v286, 0.0
  %v313 = vmax.f32 %v289, 0.0
  %v314 = vmax.f32 %v291, 0.0
  %v315 = vmax.f32 %v294, 0.0
  %v316 = vmax.f32 %v296, 0.0
  %v317 = vmax.f32 %v299, 0.0
  %v318 = vmax.f32 %v301, 0.0
  %v319 = vld [vmem:[%s4] sm:$0x1]
  %v320 = vpack.c.bf16 %v304, %v303
  %v321 = vpack.c.bf16 %v306, %v305
  %v322 = vpack.c.bf16 %v308, %v307
  %v323 = vpack.c.bf16 %v310, %v309
  %v324 = vpack.c.bf16 %v312, %v311
  %v325 = vpack.c.bf16 %v314, %v313
  %v326 = vpack.c.bf16 %v316, %v315
  %v327 = vpack.c.bf16 %v318, %v317
  %v328 = vld [vmem:[#allocation2] sm:$0x1]
  %330 = vset.pattern.permute.xlu0 0
  %331 = vperm.xlu0 %330, %v328
  %v332 = vpop.permute.xlu0 %331
  %v334 = vperm.slane %v332, 0
  %v336 = vsel %vm153, %v319, 0
  %v339 = vsel %vm153, %v320, 0
  %v342 = vsel %vm153, %v321, 0
  %v345 = vsel %vm153, %v322, 0
  %v348 = vsel %vm153, %v323, 0
  %v351 = vsel %vm153, %v324, 0
  %v354 = vsel %vm153, %v325, 0
  %v357 = vsel %vm153, %v326, 0
  %v360 = vsel %vm153, %v327, 0
  %362 = vmatpush.bf16.xpose.msra.mxu0 %v360
  %363 = vmatpush.bf16.xpose.msra.mxu0 %v357
  %364 = vmatpush.bf16.xpose.msra.mxu0 %v354
  %365 = vmatpush.bf16.xpose.msra.mxu0 %v351
  %366 = vmatpush.bf16.xpose.msra.mxu0 %v348
  %367 = vmatpush.bf16.xpose.msra.mxu0 %v345
  %368 = vmatpush.bf16.xpose.msra.mxu0 %v342
  %369 = vmatpush.bf16.xpose.msra.mxu0 %v339
  %370 = vmatmul.bf16.gmra.mxu0 %v336
  %v371 = vpop.f32.mrf.mxu0
  %v372 = vadd.f32 %v334, %v371
  %v373 = vpop.f32.mrf.mxu0
  %374 = vdwg.mxu0
  %375 = vst [vmem:[%s6] sm:$0x1] %v372
  // Predicated region
  $region26: #{mig_dpg_forward.1} parent=0 // pred_check
    _
  $region27: #{mig_dpg_forward.1} parent=0 // pred_check_branch
    %377 = sbr.rel (0) target = $region29
  $region28: #{mig_dpg_forward.1} parent=0 // pred_region
    _
  $region29: #{mig_dpg_forward.1} parent=0 // pred_fallthru
    _
  // Predicated region
  $region30: #{mig_dpg_forward.1} parent=0 // pred_check
    _
  $region31: #{mig_dpg_forward.1} parent=0 // pred_check_branch
    %379 = sbr.rel (0) target = $region33
  $region32: #{mig_dpg_forward.1} parent=0 // pred_region
    _
  $region33: #{mig_dpg_forward.1} parent=0 // pred_fallthru
    _

</llo_original>
